<compile_context>
chip_gen: v7x
topology: tpu7x:2x2x1
jax: 0.10.0
libtpu: 0.0.40
codegen_flags: <defaults>
</compile_context>

<pallas_src>
import functools

import jax
import jax.numpy as jnp
from jax.experimental import pallas as pl
from jax.experimental.pallas import tpu as pltpu


def _round_up(x, m):
    return (x + m - 1) // m * m


def _critic_kernel(meta0, meta_rest, out_lanes, s_ref, a_ref, p_ref, out_ref):
    """meta0 = ((ws_row, k_s), (wa_row, k_a), b0_row); meta_rest = ((w_row, k, b_row), ...).

    All offsets are static Python ints into the packed, sublane-aligned parameter slab.
    Activations stay f32; operands are cast to the parameter storage dtype only for the
    MXU dot (accumulation in f32 via preferred_element_type).
    """
    (ws_row, k_s), (wa_row, k_a), b0_row = meta0

    # ---- layer 0: split-K matmul over [state | action] ----
    w_s = p_ref[ws_row:ws_row + k_s, :]            # (k_s, C) static, aligned-start slice
    w_a = p_ref[wa_row:wa_row + k_a, :]            # (k_a, C)
    x = jnp.dot(s_ref[...].astype(w_s.dtype), w_s, preferred_element_type=jnp.float32)
    x = x + jnp.dot(a_ref[...].astype(w_a.dtype), w_a, preferred_element_type=jnp.float32)
    x = x + p_ref[b0_row:b0_row + 1, :].astype(jnp.float32)

    # ---- remaining layers: ReLU(previous) -> K-narrowed dot -> bias ----
    for (w_row, k, b_row) in meta_rest:
        x = jnp.maximum(x, 0.0)                    # ReLU on the previous (hidden) layer
        w = p_ref[w_row:w_row + k, :]              # (k, C)
        x = jnp.dot(x[:, :k].astype(w.dtype), w, preferred_element_type=jnp.float32)
        x = x + p_ref[b_row:b_row + 1, :].astype(jnp.float32)

    out_ref[...] = x[:, :out_lanes].astype(out_ref.dtype)   # narrow (TB, 8) store


def _pack_params(params, obs_dim, act_dim, dtype, lane_pad=128):
    """Pack all (W, b) into one zero-padded (R, C) slab with sublane-aligned blocks.

    Layer 0's weight is split at row obs_dim into a state part and an action part so
    the kernel can consume un-concatenated inputs.  Row offsets are aligned to the
    storage dtype's sublane tile (f32: 8, bf16: 16, int8/fp8: 32); zero padding keeps
    the padded matmuls exactly equivalent.
    """
    itemsize = jnp.dtype(dtype).itemsize
    align = 8 * (4 // itemsize)
    C = _round_up(max(max(w.shape[1] for w, _ in params), 1), lane_pad)

    blocks = []
    row = [0]

    def add_block(mat):                            # mat: 2D f32
        r = _round_up(mat.shape[0], align)
        pad = jnp.zeros((r, C), jnp.float32).at[:mat.shape[0], :mat.shape[1]].set(mat)
        blocks.append(pad)
        start = row[0]
        row[0] += r
        return start

    w0, b0 = params[0]
    ws_row = add_block(w0[:obs_dim])               # state part of W0
    wa_row = add_block(w0[obs_dim:])               # action part of W0
    b0_row = add_block(b0[None, :])
    meta0 = ((ws_row, obs_dim), (wa_row, act_dim), b0_row)

    meta_rest = []
    for (w, b) in params[1:]:
        w_row = add_block(w)
        b_row = add_block(b[None, :])
        meta_rest.append((w_row, w.shape[0], b_row))

    packed = jnp.concatenate(blocks, axis=0).astype(dtype)
    return packed, meta0, tuple(meta_rest), C


def critic_forward(state, action, params, *, block_b=2048, param_dtype=jnp.bfloat16):
    """Pallas Critic forward. params = list of (W, b), W: (in, out), b: (out,).

    param_dtype=jnp.bfloat16 (default, best on v6e/v7x) halves parameter DMA and runs
    single-pass on the bf16 MXU; results differ from the f32 reference at ~bf16
    precision.  Use param_dtype=jnp.float32 for exact parity (and on v5e).
    """
    B, obs_dim = state.shape
    _, act_dim = action.shape
    out_dim = params[-1][0].shape[1]
    out_lanes = _round_up(max(out_dim, 1), 8)      # narrow lane-width output (8, not 128)

    packed, meta0, meta_rest, _ = _pack_params(params, obs_dim, act_dim, param_dtype)

    # Batch tile: multiple of 8, as large as block_b allows, but capped near B/2 so the
    # "parallel" batch axis keeps >= 2 grid steps (both v7x TensorCores get work).
    # No batch padding: cdiv grid + Pallas partial-block masking handle ragged B.
    half = _round_up(pl.cdiv(B, 2), 8)
    TB = max(8, min(_round_up(block_b, 8), half))
    grid = (pl.cdiv(B, TB),)

    kernel = functools.partial(_critic_kernel, meta0, meta_rest, out_lanes)

    out = pl.pallas_call(
        kernel,
        out_shape=jax.ShapeDtypeStruct((B, out_lanes), jnp.float32),
        grid=grid,
        in_specs=[
            pl.BlockSpec((TB, obs_dim), lambda i: (i, 0)),      # batch-tiled state
            pl.BlockSpec((TB, act_dim), lambda i: (i, 0)),      # batch-tiled action
            pl.BlockSpec(packed.shape, lambda i: (0, 0)),       # params resident across steps
        ],
        out_specs=pl.BlockSpec((TB, out_lanes), lambda i: (i, 0)),
        compiler_params=pltpu.CompilerParams(
            dimension_semantics=("parallel",),                  # shard batch over v7x's 2 TCs
        ),
    )(state.astype(jnp.float32), action.astype(jnp.float32), packed)

    return out[:, :out_dim]                        # column 0 is the critic value


def init_mlp_params(key, in_dim, hidden_dim, depth, out_dim=1):
    """Init mimicking nn.Linear defaults (uniform +/- 1/sqrt(fan_in))."""
    dims = [in_dim] + [hidden_dim] * depth + [out_dim]
    params = []
    for i in range(len(dims) - 1):
        key, kw, kb = jax.random.split(key, 3)
        bound = 1.0 / jnp.sqrt(dims[i])
        w = jax.random.uniform(kw, (dims[i], dims[i + 1]), jnp.float32, -bound, bound)
        b = jax.random.uniform(kb, (dims[i + 1],), jnp.float32, -bound, bound)
        params.append((w, b))
    return params


def critic_reference(state, action, params):
    """Pure-JAX reference for correctness checking."""
    x = jnp.concatenate([state, action], axis=-1)
    n = len(params)
    for i, (w, b) in enumerate(params):
        x = x @ w + b
        if i < n - 1:
            x = jnp.maximum(x, 0.0)
    return x


if __name__ == "__main__":
    # config: obs_dim=24, act_dim=8, depth_critic=2, hidden_dim_critic=32
    OBS, ACT, HID, DEPTH = 24, 8, 32, 2

    key = jax.random.PRNGKey(0)
    k_params, k_data = jax.random.split(key)
    params = init_mlp_params(k_params, OBS + ACT, HID, DEPTH, out_dim=1)

    # B=8: single grid step. B=1000: 2-step grid (TB=504) with a ragged last block.
    for B in (8, 1000):
        ks, ka = jax.random.split(jax.random.fold_in(k_data, B))
        state = jax.random.normal(ks, (B, OBS), jnp.float32)
        action = jax.random.normal(ka, (B, ACT), jnp.float32)
        ref = critic_reference(state, action, params)

        # f32 parameter path: exact parity with the reference.
        out = jax.block_until_ready(
            critic_forward(state, action, params, param_dtype=jnp.float32))
        assert out.shape == (B, 1), out.shape
        assert jnp.allclose(out, ref, atol=1e-5, rtol=1e-5), (
            jnp.max(jnp.abs(out - ref)))

        # bf16 parameter/operand path (default; recommended on v6e/v7x): bf16-level match.
        out_bf16 = jax.block_until_ready(
            critic_forward(state, action, params, param_dtype=jnp.bfloat16))
        assert out_bf16.shape == (B, 1), out_bf16.shape
        assert jnp.allclose(out_bf16, ref, atol=5e-2, rtol=5e-2), (
            jnp.max(jnp.abs(out_bf16 - ref)))

    print("KERNEL_OK")
</pallas_src>

<mosaic_0001>
module attributes {stable_mosaic.version = 11 : i64} {
  func.func @_critic_kernel(%arg0: i32, %arg1: memref<8x24xf32, #tpu.memory_space<vmem>>, %arg2: memref<8x8xf32, #tpu.memory_space<vmem>>, %arg3: memref<120x128xf32, #tpu.memory_space<vmem>>, %arg4: memref<8x8xf32, #tpu.memory_space<vmem>>) attributes {dimension_semantics = [#tpu.dimension_semantics<parallel>], iteration_bounds = array<i64: 1>, scalar_prefetch = 0 : i64, scratch_operands = 0 : i64, tpu.core_type = #tpu.core_type<tc>, window_params = [{transform_indices = @transform_0, window_bounds = array<i64: 8, 24>}, {transform_indices = @transform_1, window_bounds = array<i64: 8, 8>}, {pipeline_mode = #tpu.pipeline_mode<synchronous>, transform_indices = @transform_2, window_bounds = array<i64: 120, 128>}, {transform_indices = @transform_3, window_bounds = array<i64: 8, 8>}]} {
    %c0 = arith.constant 0 : index
    %c0_0 = arith.constant 0 : index
    %0 = vector.load %arg3[%c0, %c0_0] : memref<120x128xf32, #tpu.memory_space<vmem>>, vector<24x128xf32>
    %c24 = arith.constant 24 : index
    %c0_1 = arith.constant 0 : index
    %1 = vector.load %arg3[%c24, %c0_1] : memref<120x128xf32, #tpu.memory_space<vmem>>, vector<8x128xf32>
    %c0_2 = arith.constant 0 : index
    %c0_3 = arith.constant 0 : index
    %2 = vector.load %arg1[%c0_2, %c0_3] : memref<8x24xf32, #tpu.memory_space<vmem>>, vector<8x24xf32>
    %cst = arith.constant dense<0.000000e+00> : vector<8x128xf32>
    %3 = tpu.matmul %2, %0, %cst {dimension_numbers = #tpu.dot_dimension_numbers<[1], [0], [0], [1], [0, 0, 1, 1], [], []>} : vector<8x24xf32>, vector<24x128xf32>, vector<8x128xf32> -> vector<8x128xf32>
    %c0_4 = arith.constant 0 : index
    %c0_5 = arith.constant 0 : index
    %4 = vector.load %arg2[%c0_4, %c0_5] : memref<8x8xf32, #tpu.memory_space<vmem>>, vector<8x8xf32>
    %cst_6 = arith.constant dense<0.000000e+00> : vector<8x128xf32>
    %5 = tpu.matmul %4, %1, %cst_6 {dimension_numbers = #tpu.dot_dimension_numbers<[1], [0], [0], [1], [0, 0, 1, 1], [], []>} : vector<8x8xf32>, vector<8x128xf32>, vector<8x128xf32> -> vector<8x128xf32>
    %6 = arith.addf %3, %5 : vector<8x128xf32>
    %c32 = arith.constant 32 : index
    %c0_7 = arith.constant 0 : index
    %7 = vector.load %arg3[%c32, %c0_7] : memref<120x128xf32, #tpu.memory_space<vmem>>, vector<1x128xf32>
    %8 = vector.broadcast %7 : vector<1x128xf32> to vector<8x128xf32>
    %9 = arith.addf %6, %8 : vector<8x128xf32>
    %cst_8 = arith.constant 0.000000e+00 : f32
    %10 = vector.broadcast %cst_8 : f32 to vector<8x128xf32>
    %11 = arith.maximumf %9, %10 : vector<8x128xf32>
    %c40 = arith.constant 40 : index
    %c0_9 = arith.constant 0 : index
    %12 = vector.load %arg3[%c40, %c0_9] : memref<120x128xf32, #tpu.memory_space<vmem>>, vector<32x128xf32>
    %13 = vector.extract_strided_slice %11 {offsets = [0, 0], sizes = [8, 32], strides = [1, 1]} : vector<8x128xf32> to vector<8x32xf32>
    %cst_10 = arith.constant dense<0.000000e+00> : vector<8x128xf32>
    %14 = tpu.matmul %13, %12, %cst_10 {dimension_numbers = #tpu.dot_dimension_numbers<[1], [0], [0], [1], [0, 0, 1, 1], [], []>} : vector<8x32xf32>, vector<32x128xf32>, vector<8x128xf32> -> vector<8x128xf32>
    %c72 = arith.constant 72 : index
    %c0_11 = arith.constant 0 : index
    %15 = vector.load %arg3[%c72, %c0_11] : memref<120x128xf32, #tpu.memory_space<vmem>>, vector<1x128xf32>
    %16 = vector.broadcast %15 : vector<1x128xf32> to vector<8x128xf32>
    %17 = arith.addf %14, %16 : vector<8x128xf32>
    %cst_12 = arith.constant 0.000000e+00 : f32
    %18 = vector.broadcast %cst_12 : f32 to vector<8x128xf32>
    %19 = arith.maximumf %17, %18 : vector<8x128xf32>
    %c80 = arith.constant 80 : index
    %c0_13 = arith.constant 0 : index
    %20 = vector.load %arg3[%c80, %c0_13] : memref<120x128xf32, #tpu.memory_space<vmem>>, vector<32x128xf32>
    %21 = vector.extract_strided_slice %19 {offsets = [0, 0], sizes = [8, 32], strides = [1, 1]} : vector<8x128xf32> to vector<8x32xf32>
    %cst_14 = arith.constant dense<0.000000e+00> : vector<8x128xf32>
    %22 = tpu.matmul %21, %20, %cst_14 {dimension_numbers = #tpu.dot_dimension_numbers<[1], [0], [0], [1], [0, 0, 1, 1], [], []>} : vector<8x32xf32>, vector<32x128xf32>, vector<8x128xf32> -> vector<8x128xf32>
    %c112 = arith.constant 112 : index
    %c0_15 = arith.constant 0 : index
    %23 = vector.load %arg3[%c112, %c0_15] : memref<120x128xf32, #tpu.memory_space<vmem>>, vector<1x128xf32>
    %24 = vector.broadcast %23 : vector<1x128xf32> to vector<8x128xf32>
    %25 = arith.addf %22, %24 : vector<8x128xf32>
    %26 = vector.extract_strided_slice %25 {offsets = [0, 0], sizes = [8, 8], strides = [1, 1]} : vector<8x128xf32> to vector<8x8xf32>
    %c0_16 = arith.constant 0 : index
    %c0_17 = arith.constant 0 : index
    %27 = vector.load %arg4[%c0_16, %c0_17] : memref<8x8xf32, #tpu.memory_space<vmem>>, vector<8x8xf32>
    tpu.vector_store %arg4[%c0_16, %c0_17], %26 {strides = array<i32>} : memref<8x8xf32, #tpu.memory_space<vmem>>, vector<8x8xf32>,
    return
  }
  func.func @transform_0(%arg0: i32) -> (i32, i32) {
    %c0_i32 = arith.constant 0 : i32
    %c0_i32_0 = arith.constant 0 : i32
    return %arg0, %c0_i32 : i32, i32
  }
  func.func @transform_1(%arg0: i32) -> (i32, i32) {
    %c0_i32 = arith.constant 0 : i32
    %c0_i32_0 = arith.constant 0 : i32
    return %arg0, %c0_i32 : i32, i32
  }
  func.func @transform_2(%arg0: i32) -> (i32, i32) {
    %c0_i32 = arith.constant 0 : i32
    %c0_i32_0 = arith.constant 0 : i32
    %c0_i32_1 = arith.constant 0 : i32
    return %c0_i32, %c0_i32_0 : i32, i32
  }
  func.func @transform_3(%arg0: i32) -> (i32, i32) {
    %c0_i32 = arith.constant 0 : i32
    %c0_i32_0 = arith.constant 0 : i32
    return %arg0, %c0_i32 : i32, i32
  }
}

</mosaic_0001>

<llo_original>
// kernel: tpu_custom_call.1
$region0: #{tpu_custom_call.1}
  #allocation0 [shape = 'u32[]', space=smem, size = 0x4, offset = 0x4, fixed_abs, tag = 'smem constant byte address 0x4 - core index']
  #allocation1 [shape = 'u32[144,128]{1,0:T(1,128)}', space=vmem, size = 0x12000, scoped, tag = 'internal scratch']
  %s0 = inlined_call_operand.hbm [shape: f32[8,24], index: 0, kind: input, shape index: {}]
  %s1 = inlined_call_operand.hbm [shape: f32[8,8], index: 1, kind: input, shape index: {}]
  %s2 = inlined_call_operand.hbm [shape: f32[120,128], index: 2, kind: input, shape index: {}]
  %s3 = inlined_call_operand.hbm [shape: f32[8,8], index: 3, kind: output, shape index: {}]
  %s4 = sld [smem:[#allocation0]]
  $region34: #{tpu_custom_call.1} parent=0
    _
  %s6 = ssub.s32 1, %s4
  %s7 = scalar_select 0, %s6, %s4
  $region1: #{tpu_custom_call.1} parent=0
    #allocation2 [shape = 'u8[4096]{0}', space=vmem, size = 0x1000, scoped, tag = 'input window, operand 0, single buffered']
    #allocation3 [shape = 's32[1]{0}', space=sflag, size = 0x4, scoped, tag = 'scoped memory for tpu_custom_call.1']
    #allocation4 [shape = 's32[1]{0}', space=sflag, size = 0x4, scoped, tag = 'scoped memory for tpu_custom_call.1']
    #allocation5 [shape = 'u8[4096]{0}', space=vmem, size = 0x1000, scoped, tag = 'input window, operand 1, single buffered']
    #allocation6 [shape = 's32[1]{0}', space=sflag, size = 0x4, scoped, tag = 'scoped memory for tpu_custom_call.1']
    #allocation7 [shape = 'u8[61440]{0}', space=vmem, size = 0xf000, scoped, tag = 'input window, operand 2, single buffered']
    #allocation8 [shape = 'u8[4096]{0}', space=vmem, size = 0x1000, scoped, tag = 'output window, operand 0, single buffered']
    %8 = vsyncpa [#allocation3], 0
    %9 = vsyncpa [#allocation6], 0
    %10 = vsyncpa [#allocation4], 0
    // Predicated region
    $region2: #{tpu_custom_call.1} parent=1 // pred_check
      _
    $region3: #{tpu_custom_call.1} parent=1 // pred_check_branch
      %12 = sbr.rel (0) target = $region5
    $region4: #{tpu_custom_call.1} parent=1 // pred_region
      %s14 = ssub.s32 128, 128
      %15 = vsyncadd [#allocation3], %s14
      %s17 = sshll.u32 [#allocation2], 4
      %s18 = int_to_ptr.vmem [resolvable:$true] %s17
      %20 = dma.hbm_to_vmem [thread:$0]  %s0, 128, %s18, [#allocation3]
    $region5: #{tpu_custom_call.1} parent=1 // pred_fallthru
      _
    // Predicated region
    $region6: #{tpu_custom_call.1} parent=1 // pred_check
      _
    $region7: #{tpu_custom_call.1} parent=1 // pred_check_branch
      %22 = sbr.rel (0) target = $region9
    $region8: #{tpu_custom_call.1} parent=1 // pred_region
      %s24 = ssub.s32 128, 128
      %25 = vsyncadd [#allocation6], %s24
      %s27 = sshll.u32 [#allocation5], 4
      %s28 = int_to_ptr.vmem [resolvable:$true] %s27
      %30 = dma.hbm_to_vmem [thread:$0]  %s1, 128, %s28, [#allocation6]
    $region9: #{tpu_custom_call.1} parent=1 // pred_fallthru
      _
    // Predicated region
    $region10: #{tpu_custom_call.1} parent=1 // pred_check
      _
    $region11: #{tpu_custom_call.1} parent=1 // pred_check_branch
      %32 = sbr.rel (0) target = $region13
    $region12: #{tpu_custom_call.1} parent=1 // pred_region
      %s34 = ssub.s32 1920, 1920
      %35 = vsyncadd [#allocation6], %s34
      %s36 = sshll.u32 [#allocation7], 4
      %s37 = int_to_ptr.vmem [resolvable:$true] %s36
      %42 = dma.hbm_to_vmem [thread:$0]  %s2, 1920, %s37, [#allocation6], 128, 128, 8
    $region13: #{tpu_custom_call.1} parent=1 // pred_fallthru
      _
    // Predicated region
    $region14: #{tpu_custom_call.1} parent=1 // pred_check
      _
    $region15: #{tpu_custom_call.1} parent=1 // pred_check_branch
      %44 = sbr.rel (0) target = $region17
    $region16: #{tpu_custom_call.1} parent=1 // pred_region
      %45 = dma.done [#allocation3], 128
    $region17: #{tpu_custom_call.1} parent=1 // pred_fallthru
      _
    // Predicated region
    $region18: #{tpu_custom_call.1} parent=1 // pred_check
      _
    $region19: #{tpu_custom_call.1} parent=1 // pred_check_branch
      %47 = sbr.rel (0) target = $region21
    $region20: #{tpu_custom_call.1} parent=1 // pred_region
      %48 = dma.done [#allocation6], 128
    $region21: #{tpu_custom_call.1} parent=1 // pred_fallthru
      _
    // Predicated region
    $region22: #{tpu_custom_call.1} parent=1 // pred_check
      _
    $region23: #{tpu_custom_call.1} parent=1 // pred_check_branch
      %50 = sbr.rel (0) target = $region25
    $region24: #{tpu_custom_call.1} parent=1 // pred_region
      %51 = dma.done [#allocation6], 1920
    $region25: #{tpu_custom_call.1} parent=1 // pred_fallthru
      _
    %v52 = vld [vmem:[#allocation7] sm:$0xff]
    %v53 = vld [vmem:[#allocation7 + $0x8] sm:$0xff]
    %v54 = vld [vmem:[#allocation7 + $0x10] sm:$0xff]
    %v55 = vld [vmem:[#allocation7 + $0x18] sm:$0xff]
    %v56 = vld [vmem:[#allocation2] sm:$0xff]
    %v57 = vld [vmem:[#allocation5] sm:$0xff]
    %vm58 = vcmask 64512
    %v60 = vsel %vm58, %v57, 0
    %62 = vmatprep.subr.mxu0 0.0
    %63 = vmatpush1.msra.mxu0 %v55
    %64 = vmatprep.subr.mxu0 0.0
    %65 = vmatpush1.msra.mxu0 0.0
    %66 = vmatprep.subr.mxu0 0.0
    %67 = vmatpush1.msra.mxu0 0.0
    %68 = vmatprep.subr.mxu0 0.0
    %69 = vmatpush1.msra.mxu0 0.0
    %70 = vmatprep.subr.mxu0 0.0
    %71 = vmatpush1.msra.mxu0 0.0
    %72 = vmatprep.subr.mxu0 0.0
    %73 = vmatpush1.msra.mxu0 0.0
    %74 = vmatprep.subr.mxu0 0.0
    %75 = vmatpush1.msra.mxu0 0.0
    %76 = vmatprep.subr.mxu0 0.0
    %77 = vmatpush1.msra.mxu0 0.0
    %78 = vmatprep.subr.mxu0 0.0
    %79 = vmatpush1.msra.mxu0 0.0
    %80 = vmatprep.subr.mxu0 0.0
    %81 = vmatpush1.msra.mxu0 0.0
    %82 = vmatprep.subr.mxu0 0.0
    %83 = vmatpush1.msra.mxu0 0.0
    %84 = vmatprep.subr.mxu0 0.0
    %85 = vmatpush1.msra.mxu0 0.0
    %86 = vmatprep.subr.mxu0 0.0
    %87 = vmatpush1.msra.mxu0 0.0
    %88 = vmatprep.subr.mxu0 0.0
    %89 = vmatpush1.msra.mxu0 0.0
    %90 = vmatprep.subr.mxu0 0.0
    %91 = vmatpush1.msra.mxu0 0.0
    %92 = vmatprep.subr.mxu0 0.0
    %93 = vmatpush1.msra.mxu0 0.0
    %94 = vmatprep.subr.mxu0 0.0
    %95 = vmatpush1.msra.mxu0 0.0
    %96 = vmatprep.subr.mxu0 0.0
    %97 = vmatpush1.msra.mxu0 0.0
    %98 = vmatprep.subr.mxu0 0.0
    %99 = vmatpush1.msra.mxu0 0.0
    %100 = vmatprep.subr.mxu0 0.0
    %101 = vmatpush1.msra.mxu0 0.0
    %102 = vmatprep.subr.mxu0 0.0
    %103 = vmatpush1.msra.mxu0 0.0
    %104 = vmatprep.subr.mxu0 0.0
    %105 = vmatpush1.msra.mxu0 0.0
    %106 = vmatprep.subr.mxu0 0.0
    %107 = vmatpush1.msra.mxu0 0.0
    %108 = vmatprep.subr.mxu0 0.0
    %109 = vmatpush1.msra.mxu0 0.0
    %110 = vmatprep.subr.mxu0 0.0
    %111 = vmatpush1.msra.mxu0 0.0
    %112 = vmatprep.subr.mxu0 0.0
    %113 = vmatpush1.msra.mxu0 0.0
    %114 = vmatprep.subr.mxu0 0.0
    %115 = vmatpush1.msra.mxu0 0.0
    %116 = vmatprep.subr.mxu0 0.0
    %117 = vmatpush1.msra.mxu0 0.0
    %118 = vmatprep.subr.mxu0 0.0
    %119 = vmatpush1.msra.mxu0 0.0
    %120 = vmatprep.subr.mxu0 0.0
    %121 = vmatpush1.msra.mxu0 0.0
    %122 = vmatprep.subr.mxu0 0.0
    %123 = vmatpush1.msra.mxu0 0.0
    %124 = vmatprep.subr.mxu0 0.0
    %125 = vmatpush1.msra.mxu0 0.0
    %126 = vmatprep.mubr.f32.mxu0 0.0
    %127 = vmatmul.mubr.f32.gmra.mrb[0].mxu0 %v60
    %v128 = vpop.f32.mrb[0].mxu0
    %v129 = vadd.f32 0.0, %v128
    %v130 = vpop.f32.mrb[0].mxu0
    %131 = vdwg.mxu0
    %vm132 = vcmask 195584
    %v134 = vsel %vm132, %v56, 0
    %136 = vmatprep.subr.mxu0 0.0
    %137 = vmatpush1.msra.mxu0 %v52
    %138 = vmatprep.subr.mxu0 0.0
    %139 = vmatpush1.msra.mxu0 %v53
    %140 = vmatprep.subr.mxu0 0.0
    %141 = vmatpush1.msra.mxu0 %v54
    %142 = vmatprep.subr.mxu0 0.0
    %143 = vmatpush1.msra.mxu0 0.0
    %144 = vmatprep.subr.mxu0 0.0
    %145 = vmatpush1.msra.mxu0 0.0
    %146 = vmatprep.subr.mxu0 0.0
    %147 = vmatpush1.msra.mxu0 0.0
    %148 = vmatprep.subr.mxu0 0.0
    %149 = vmatpush1.msra.mxu0 0.0
    %150 = vmatprep.subr.mxu0 0.0
    %151 = vmatpush1.msra.mxu0 0.0
    %152 = vmatprep.subr.mxu0 0.0
    %153 = vmatpush1.msra.mxu0 0.0
    %154 = vmatprep.subr.mxu0 0.0
    %155 = vmatpush1.msra.mxu0 0.0
    %156 = vmatprep.subr.mxu0 0.0
    %157 = vmatpush1.msra.mxu0 0.0
    %158 = vmatprep.subr.mxu0 0.0
    %159 = vmatpush1.msra.mxu0 0.0
    %160 = vmatprep.subr.mxu0 0.0
    %161 = vmatpush1.msra.mxu0 0.0
    %162 = vmatprep.subr.mxu0 0.0
    %163 = vmatpush1.msra.mxu0 0.0
    %164 = vmatprep.subr.mxu0 0.0
    %165 = vmatpush1.msra.mxu0 0.0
    %166 = vmatprep.subr.mxu0 0.0
    %167 = vmatpush1.msra.mxu0 0.0
    %168 = vmatprep.subr.mxu0 0.0
    %169 = vmatpush1.msra.mxu0 0.0
    %170 = vmatprep.subr.mxu0 0.0
    %171 = vmatpush1.msra.mxu0 0.0
    %172 = vmatprep.subr.mxu0 0.0
    %173 = vmatpush1.msra.mxu0 0.0
    %174 = vmatprep.subr.mxu0 0.0
    %175 = vmatpush1.msra.mxu0 0.0
    %176 = vmatprep.subr.mxu0 0.0
    %177 = vmatpush1.msra.mxu0 0.0
    %178 = vmatprep.subr.mxu0 0.0
    %179 = vmatpush1.msra.mxu0 0.0
    %180 = vmatprep.subr.mxu0 0.0
    %181 = vmatpush1.msra.mxu0 0.0
    %182 = vmatprep.subr.mxu0 0.0
    %183 = vmatpush1.msra.mxu0 0.0
    %184 = vmatprep.subr.mxu0 0.0
    %185 = vmatpush1.msra.mxu0 0.0
    %186 = vmatprep.subr.mxu0 0.0
    %187 = vmatpush1.msra.mxu0 0.0
    %188 = vmatprep.subr.mxu0 0.0
    %189 = vmatpush1.msra.mxu0 0.0
    %190 = vmatprep.subr.mxu0 0.0
    %191 = vmatpush1.msra.mxu0 0.0
    %192 = vmatprep.subr.mxu0 0.0
    %193 = vmatpush1.msra.mxu0 0.0
    %194 = vmatprep.subr.mxu0 0.0
    %195 = vmatpush1.msra.mxu0 0.0
    %196 = vmatprep.subr.mxu0 0.0
    %197 = vmatpush1.msra.mxu0 0.0
    %198 = vmatprep.subr.mxu0 0.0
    %199 = vmatpush1.msra.mxu0 0.0
    %200 = vmatprep.mubr.f32.mxu0 0.0
    %201 = vmatmul.mubr.f32.gmra.mrb[0].mxu0 %v134
    %v202 = vpop.f32.mrb[0].mxu0
    %v203 = vadd.f32 %v129, %v202
    %v204 = vpop.f32.mrb[0].mxu0
    %205 = vdwg.mxu0
    %v206 = vld [vmem:[#allocation7 + $0x20] sm:$0x1]
    %v207 = vlaneseq
    %v208 = vshrl.u32 %v207, 7
    %v209 = vsub.s32 0, %v208
    %v210 = vrot.slane %v206, %v209
    %v211 = vadd.f32 %v203, %v210
    %v212 = vmax.f32 %v211, 0.0
    %v213 = vld [vmem:[#allocation7 + $0x28] sm:$0xff]
    %v214 = vld [vmem:[#allocation7 + $0x30] sm:$0xff]
    %v215 = vld [vmem:[#allocation7 + $0x38] sm:$0xff]
    %v216 = vld [vmem:[#allocation7 + $0x40] sm:$0xff]
    %v217 = vld [vmem:[#allocation7 + $0x48] sm:$0x1]
    %v218 = vlaneseq
    %v219 = vshrl.u32 %v218, 7
    %v220 = vsub.s32 0, %v219
    %v221 = vrot.slane %v217, %v220
    %vm222 = vcmask 261120
    %v224 = vsel %vm222, %v212, 0
    %226 = vmatprep.subr.mxu0 0.0
    %227 = vmatpush1.msra.mxu0 %v213
    %228 = vmatprep.subr.mxu0 0.0
    %229 = vmatpush1.msra.mxu0 %v214
    %230 = vmatprep.subr.mxu0 0.0
    %231 = vmatpush1.msra.mxu0 %v215
    %232 = vmatprep.subr.mxu0 0.0
    %233 = vmatpush1.msra.mxu0 %v216
    %234 = vmatprep.subr.mxu0 0.0
    %235 = vmatpush1.msra.mxu0 0.0
    %236 = vmatprep.subr.mxu0 0.0
    %237 = vmatpush1.msra.mxu0 0.0
    %238 = vmatprep.subr.mxu0 0.0
    %239 = vmatpush1.msra.mxu0 0.0
    %240 = vmatprep.subr.mxu0 0.0
    %241 = vmatpush1.msra.mxu0 0.0
    %242 = vmatprep.subr.mxu0 0.0
    %243 = vmatpush1.msra.mxu0 0.0
    %244 = vmatprep.subr.mxu0 0.0
    %245 = vmatpush1.msra.mxu0 0.0
    %246 = vmatprep.subr.mxu0 0.0
    %247 = vmatpush1.msra.mxu0 0.0
    %248 = vmatprep.subr.mxu0 0.0
    %249 = vmatpush1.msra.mxu0 0.0
    %250 = vmatprep.subr.mxu0 0.0
    %251 = vmatpush1.msra.mxu0 0.0
    %252 = vmatprep.subr.mxu0 0.0
    %253 = vmatpush1.msra.mxu0 0.0
    %254 = vmatprep.subr.mxu0 0.0
    %255 = vmatpush1.msra.mxu0 0.0
    %256 = vmatprep.subr.mxu0 0.0
    %257 = vmatpush1.msra.mxu0 0.0
    %258 = vmatprep.subr.mxu0 0.0
    %259 = vmatpush1.msra.mxu0 0.0
    %260 = vmatprep.subr.mxu0 0.0
    %261 = vmatpush1.msra.mxu0 0.0
    %262 = vmatprep.subr.mxu0 0.0
    %263 = vmatpush1.msra.mxu0 0.0
    %264 = vmatprep.subr.mxu0 0.0
    %265 = vmatpush1.msra.mxu0 0.0
    %266 = vmatprep.subr.mxu0 0.0
    %267 = vmatpush1.msra.mxu0 0.0
    %268 = vmatprep.subr.mxu0 0.0
    %269 = vmatpush1.msra.mxu0 0.0
    %270 = vmatprep.subr.mxu0 0.0
    %271 = vmatpush1.msra.mxu0 0.0
    %272 = vmatprep.subr.mxu0 0.0
    %273 = vmatpush1.msra.mxu0 0.0
    %274 = vmatprep.subr.mxu0 0.0
    %275 = vmatpush1.msra.mxu0 0.0
    %276 = vmatprep.subr.mxu0 0.0
    %277 = vmatpush1.msra.mxu0 0.0
    %278 = vmatprep.subr.mxu0 0.0
    %279 = vmatpush1.msra.mxu0 0.0
    %280 = vmatprep.subr.mxu0 0.0
    %281 = vmatpush1.msra.mxu0 0.0
    %282 = vmatprep.subr.mxu0 0.0
    %283 = vmatpush1.msra.mxu0 0.0
    %284 = vmatprep.subr.mxu0 0.0
    %285 = vmatpush1.msra.mxu0 0.0
    %286 = vmatprep.subr.mxu0 0.0
    %287 = vmatpush1.msra.mxu0 0.0
    %288 = vmatprep.subr.mxu0 0.0
    %289 = vmatpush1.msra.mxu0 0.0
    %290 = vmatprep.mubr.f32.mxu0 0.0
    %291 = vmatmul.mubr.f32.gmra.mrb[0].mxu0 %v224
    %v292 = vpop.f32.mrb[0].mxu0
    %v293 = vadd.f32 %v221, %v292
    %v294 = vpop.f32.mrb[0].mxu0
    %295 = vdwg.mxu0
    %v296 = vmax.f32 %v293, 0.0
    %v297 = vld [vmem:[#allocation7 + $0x50] sm:$0xff]
    %v298 = vld [vmem:[#allocation7 + $0x58] sm:$0xff]
    %v299 = vld [vmem:[#allocation7 + $0x60] sm:$0xff]
    %v300 = vld [vmem:[#allocation7 + $0x68] sm:$0xff]
    %v301 = vld [vmem:[#allocation7 + $0x70] sm:$0x1]
    %v302 = vlaneseq
    %v303 = vshrl.u32 %v302, 7
    %v304 = vsub.s32 0, %v303
    %v305 = vrot.slane %v301, %v304
    %v307 = vsel %vm222, %v296, 0
    %309 = vmatprep.subr.mxu0 0.0
    %310 = vmatpush1.msra.mxu0 %v297
    %311 = vmatprep.subr.mxu0 0.0
    %312 = vmatpush1.msra.mxu0 %v298
    %313 = vmatprep.subr.mxu0 0.0
    %314 = vmatpush1.msra.mxu0 %v299
    %315 = vmatprep.subr.mxu0 0.0
    %316 = vmatpush1.msra.mxu0 %v300
    %317 = vmatprep.subr.mxu0 0.0
    %318 = vmatpush1.msra.mxu0 0.0
    %319 = vmatprep.subr.mxu0 0.0
    %320 = vmatpush1.msra.mxu0 0.0
    %321 = vmatprep.subr.mxu0 0.0
    %322 = vmatpush1.msra.mxu0 0.0
    %323 = vmatprep.subr.mxu0 0.0
    %324 = vmatpush1.msra.mxu0 0.0
    %325 = vmatprep.subr.mxu0 0.0
    %326 = vmatpush1.msra.mxu0 0.0
    %327 = vmatprep.subr.mxu0 0.0
    %328 = vmatpush1.msra.mxu0 0.0
    %329 = vmatprep.subr.mxu0 0.0
    %330 = vmatpush1.msra.mxu0 0.0
    %331 = vmatprep.subr.mxu0 0.0
    %332 = vmatpush1.msra.mxu0 0.0
    %333 = vmatprep.subr.mxu0 0.0
    %334 = vmatpush1.msra.mxu0 0.0
    %335 = vmatprep.subr.mxu0 0.0
    %336 = vmatpush1.msra.mxu0 0.0
    %337 = vmatprep.subr.mxu0 0.0
    %338 = vmatpush1.msra.mxu0 0.0
    %339 = vmatprep.subr.mxu0 0.0
    %340 = vmatpush1.msra.mxu0 0.0
    %341 = vmatprep.subr.mxu0 0.0
    %342 = vmatpush1.msra.mxu0 0.0
    %343 = vmatprep.subr.mxu0 0.0
    %344 = vmatpush1.msra.mxu0 0.0
    %345 = vmatprep.subr.mxu0 0.0
    %346 = vmatpush1.msra.mxu0 0.0
    %347 = vmatprep.subr.mxu0 0.0
    %348 = vmatpush1.msra.mxu0 0.0
    %349 = vmatprep.subr.mxu0 0.0
    %350 = vmatpush1.msra.mxu0 0.0
    %351 = vmatprep.subr.mxu0 0.0
    %352 = vmatpush1.msra.mxu0 0.0
    %353 = vmatprep.subr.mxu0 0.0
    %354 = vmatpush1.msra.mxu0 0.0
    %355 = vmatprep.subr.mxu0 0.0
    %356 = vmatpush1.msra.mxu0 0.0
    %357 = vmatprep.subr.mxu0 0.0
    %358 = vmatpush1.msra.mxu0 0.0
    %359 = vmatprep.subr.mxu0 0.0
    %360 = vmatpush1.msra.mxu0 0.0
    %361 = vmatprep.subr.mxu0 0.0
    %362 = vmatpush1.msra.mxu0 0.0
    %363 = vmatprep.subr.mxu0 0.0
    %364 = vmatpush1.msra.mxu0 0.0
    %365 = vmatprep.subr.mxu0 0.0
    %366 = vmatpush1.msra.mxu0 0.0
    %367 = vmatprep.subr.mxu0 0.0
    %368 = vmatpush1.msra.mxu0 0.0
    %369 = vmatprep.subr.mxu0 0.0
    %370 = vmatpush1.msra.mxu0 0.0
    %371 = vmatprep.subr.mxu0 0.0
    %372 = vmatpush1.msra.mxu0 0.0
    %373 = vmatprep.mubr.f32.mxu0 0.0
    %374 = vmatmul.mubr.f32.gmra.mrb[0].mxu0 %v307
    %v375 = vpop.f32.mrb[0].mxu0
    %v376 = vadd.f32 %v305, %v375
    %v377 = vpop.f32.mrb[0].mxu0
    %378 = vdwg.mxu0
    %379 = vst.msk [vmem:[#allocation8] sm:$0xff] %vm58, %v376
    // Predicated region
    $region26: #{tpu_custom_call.1} parent=1 // pred_check
      _
    $region27: #{tpu_custom_call.1} parent=1 // pred_check_branch
      %381 = sbr.rel (0) target = $region29
    $region28: #{tpu_custom_call.1} parent=1 // pred_region
      %s383 = ssub.s32 128, 128
      %384 = vsyncadd [#allocation4], %s383
      %s386 = sshll.u32 [#allocation8], 4
      %s387 = int_to_ptr.vmem [resolvable:$true] %s386
      %389 = dma.vmem_to_hbm [thread:$0]  %s387, 128, %s3, [#allocation4]
    $region29: #{tpu_custom_call.1} parent=1 // pred_fallthru
      _
    // Predicated region
    $region30: #{tpu_custom_call.1} parent=1 // pred_check
      _
    $region31: #{tpu_custom_call.1} parent=1 // pred_check_branch
      %391 = sbr.rel (0) target = $region33
    $region32: #{tpu_custom_call.1} parent=1 // pred_region
      %392 = dma.done [#allocation4], 128
    $region33: #{tpu_custom_call.1} parent=1 // pred_fallthru
      _
    %393 = vsyncpa [#allocation3], 1
    %394 = vsyncpa [#allocation6], 1
    %395 = vsyncpa [#allocation4], 1

</llo_original>
